<compile_context>
chip_gen: v7x
topology: tpu7x:2x2x1
jax: 0.10.0
libtpu: 0.0.40
codegen_flags: <defaults>
</compile_context>

<pallas_src>
import jax
import jax.numpy as jnp
from jax.experimental import pallas as pl
from jax.experimental.pallas import tpu as pltpu


def _round_up(x, m):
    return (x + m - 1) // m * m


def xornet_kernel(xt_ref, w1_ref, b1_ref, w2_ref, b2_ref, o_ref):
    # fc1 (transposed): (Hp, nbits) @ (nbits, TB) -> (Hp, TB); batch is lane-dense.
    h = jnp.dot(w1_ref[...], xt_ref[...], preferred_element_type=jnp.float32)
    h = jnp.tanh(h + b1_ref[...])                           # bias bcast over lanes; EUP tanh
    # fc2 (N=1): VPU multiply + sublane reduce (XLU); no second MXU pass.
    out = jnp.sum(h * w2_ref[...], axis=0, keepdims=True)   # (1, TB)
    o_ref[...] = (out + b2_ref[0]).astype(o_ref.dtype)      # b2 scalar from SMEM


def xornet_forward(x, w1t, b1c, w2c, b2, *, max_block_b=65536):
    """XORNet forward.

    x    : (B, nbits) f32   -- same layout as the torch module's input
    w1t  : (Hp, nbits) f32  -- fc1 weight in torch (out, in) layout, hsize padded to Hp
    b1c  : (Hp, 1)     f32  -- fc1 bias column (zeros in padded rows)
    w2c  : (Hp, 1)     f32  -- fc2 weight column (zeros in padded rows)
    b2   : (1,)        f32  -- fc2 bias scalar (lives in SMEM)
    returns (B,) f32 (matches torch's out.flatten())
    """
    B, nbits = x.shape
    hp = w1t.shape[0]

    # Lane-dense batch tile: multiple of 128, as large as reasonable, adaptive to B.
    tb = min(max_block_b, _round_up(B, 128))
    b_pad = _round_up(B, tb)
    grid = (pl.cdiv(b_pad, tb),)

    # Present batch on the lane axis (and pad to a tile multiple). For the tiny demo
    # this is negligible; at production batch sizes the data should already be
    # produced in (nbits, B) layout so this transpose disappears.
    xt = jnp.zeros((nbits, b_pad), x.dtype).at[:, :B].set(x.T)

    out = pl.pallas_call(
        xornet_kernel,
        out_shape=jax.ShapeDtypeStruct((1, b_pad), jnp.float32),
        grid=grid,
        in_specs=[
            pl.BlockSpec((nbits, tb), lambda i: (0, i)),          # activation tile
            pl.BlockSpec((hp, nbits), lambda i: (0, 0)),          # weights: VMEM-resident
            pl.BlockSpec((hp, 1), lambda i: (0, 0)),              # b1 column, resident
            pl.BlockSpec((hp, 1), lambda i: (0, 0)),              # w2 column, resident
            pl.BlockSpec(memory_space=pltpu.MemorySpace.SMEM),    # b2 scalar in SMEM
        ],
        out_specs=pl.BlockSpec((1, tb), lambda i: (0, i)),        # lane-dense output slab
        compiler_params=pltpu.CompilerParams(
            dimension_semantics=("parallel",)),                   # v7x: 2 TCs share the grid
    )(xt, w1t, b1c, w2c, b2)

    # flatten() + drop batch padding: free XLA glue.
    return out.reshape(-1)[:B]


def init_params(key, nbits=2, hsize=3):
    """nn.Linear-style U(-1/sqrt(fan_in), 1/sqrt(fan_in)) init (logical shapes)."""
    k1, k2, k3, k4 = jax.random.split(key, 4)
    bound1 = 1.0 / jnp.sqrt(float(nbits))
    bound2 = 1.0 / jnp.sqrt(float(hsize))
    w1 = jax.random.uniform(k1, (hsize, nbits), jnp.float32, -bound1, bound1)  # (out, in)
    b1 = jax.random.uniform(k2, (hsize,), jnp.float32, -bound1, bound1)
    w2 = jax.random.uniform(k3, (1, hsize), jnp.float32, -bound2, bound2)      # (out, in)
    b2 = jax.random.uniform(k4, (1,), jnp.float32, -bound2, bound2)
    return w1, b1, w2, b2


def pack_params(w1, b1, w2, b2):
    """Zero-pad hsize to a sublane-friendly width once, at setup time."""
    hsize, nbits = w1.shape
    hp = _round_up(hsize, 8)
    w1t = jnp.zeros((hp, nbits), jnp.float32).at[:hsize, :].set(w1)
    b1c = jnp.zeros((hp, 1), jnp.float32).at[:hsize, 0].set(b1)
    w2c = jnp.zeros((hp, 1), jnp.float32).at[:hsize, 0].set(w2[0])
    return w1t, b1c, w2c, b2


if __name__ == "__main__":
    nbits, hsize, batch = 2, 3, 8
    key = jax.random.PRNGKey(0)
    k_params, k_x = jax.random.split(key)

    w1, b1, w2, b2 = init_params(k_params, nbits=nbits, hsize=hsize)
    w1t, b1c, w2c, b2v = pack_params(w1, b1, w2, b2)

    # bit sequences in {0., 1.}
    x = jax.random.bernoulli(k_x, 0.5, (batch, nbits)).astype(jnp.float32)

    out = xornet_forward(x, w1t, b1c, w2c, b2v)
    out = jax.block_until_ready(out)

    # reference check in plain JAX (unpadded logical params)
    ref = (jnp.tanh(x @ w1.T + b1) @ w2.T + b2).reshape(-1)
    assert out.shape == (batch,)
    assert jnp.allclose(out, ref, atol=1e-5, rtol=1e-5), (out, ref)

    print("KERNEL_OK")
</pallas_src>

<mosaic_0001>
module attributes {stable_mosaic.version = 11 : i64} {
  func.func @xornet_kernel(%arg0: i32, %arg1: memref<2x128xf32, #tpu.memory_space<vmem>>, %arg2: memref<8x2xf32, #tpu.memory_space<vmem>>, %arg3: memref<8x1xf32, #tpu.memory_space<vmem>>, %arg4: memref<8x1xf32, #tpu.memory_space<vmem>>, %arg5: memref<1xf32, #tpu.memory_space<smem>>, %arg6: memref<1x128xf32, #tpu.memory_space<vmem>>) attributes {dimension_semantics = [#tpu.dimension_semantics<parallel>], iteration_bounds = array<i64: 1>, scalar_prefetch = 0 : i64, scratch_operands = 0 : i64, tpu.core_type = #tpu.core_type<tc>, window_params = [{transform_indices = @transform_0, window_bounds = array<i64: 2, 128>}, {pipeline_mode = #tpu.pipeline_mode<synchronous>, transform_indices = @transform_1, window_bounds = array<i64: 8, 2>}, {pipeline_mode = #tpu.pipeline_mode<synchronous>, transform_indices = @transform_2, window_bounds = array<i64: 8, 1>}, {pipeline_mode = #tpu.pipeline_mode<synchronous>, transform_indices = @transform_3, window_bounds = array<i64: 8, 1>}, {transform_indices = @transform_4, window_bounds = array<i64: 1>}, {transform_indices = @transform_5, window_bounds = array<i64: 1, 128>}]} {
    %c0 = arith.constant 0 : index
    %c0_0 = arith.constant 0 : index
    %0 = vector.load %arg2[%c0, %c0_0] : memref<8x2xf32, #tpu.memory_space<vmem>>, vector<8x2xf32>
    %c0_1 = arith.constant 0 : index
    %c0_2 = arith.constant 0 : index
    %1 = vector.load %arg1[%c0_1, %c0_2] : memref<2x128xf32, #tpu.memory_space<vmem>>, vector<2x128xf32>
    %cst = arith.constant dense<0.000000e+00> : vector<8x128xf32>
    %2 = tpu.matmul %0, %1, %cst {dimension_numbers = #tpu.dot_dimension_numbers<[1], [0], [0], [1], [0, 0, 1, 1], [], []>} : vector<8x2xf32>, vector<2x128xf32>, vector<8x128xf32> -> vector<8x128xf32>
    %c0_3 = arith.constant 0 : index
    %c0_4 = arith.constant 0 : index
    %3 = vector.load %arg3[%c0_3, %c0_4] : memref<8x1xf32, #tpu.memory_space<vmem>>, vector<8x1xf32>
    %4 = vector.broadcast %3 : vector<8x1xf32> to vector<8x128xf32>
    %5 = arith.addf %2, %4 : vector<8x128xf32>
    %6 = math.tanh %5 : vector<8x128xf32>
    %c0_5 = arith.constant 0 : index
    %c0_6 = arith.constant 0 : index
    %7 = vector.load %arg4[%c0_5, %c0_6] : memref<8x1xf32, #tpu.memory_space<vmem>>, vector<8x1xf32>
    %8 = vector.broadcast %7 : vector<8x1xf32> to vector<8x128xf32>
    %9 = arith.mulf %6, %8 : vector<8x128xf32>
    %cst_7 = arith.constant dense<0.000000e+00> : vector<128xf32>
    %10 = vector.multi_reduction <add>, %9, %cst_7 [0] : vector<8x128xf32> to vector<128xf32>
    %11 = vector.shape_cast %10 : vector<128xf32> to vector<1x128xf32>
    %c0_8 = arith.constant 0 : index
    %12 = memref.load %arg5[%c0_8] : memref<1xf32, #tpu.memory_space<smem>>
    %13 = vector.broadcast %12 : f32 to vector<1x128xf32>
    %14 = arith.addf %11, %13 : vector<1x128xf32>
    %c0_9 = arith.constant 0 : index
    %c0_10 = arith.constant 0 : index
    %15 = vector.load %arg6[%c0_9, %c0_10] : memref<1x128xf32, #tpu.memory_space<vmem>>, vector<1x128xf32>
    tpu.vector_store %arg6[%c0_9, %c0_10], %14 {strides = array<i32>} : memref<1x128xf32, #tpu.memory_space<vmem>>, vector<1x128xf32>,
    return
  }
  func.func @transform_0(%arg0: i32) -> (i32, i32) {
    %c0_i32 = arith.constant 0 : i32
    %c0_i32_0 = arith.constant 0 : i32
    return %c0_i32, %arg0 : i32, i32
  }
  func.func @transform_1(%arg0: i32) -> (i32, i32) {
    %c0_i32 = arith.constant 0 : i32
    %c0_i32_0 = arith.constant 0 : i32
    %c0_i32_1 = arith.constant 0 : i32
    return %c0_i32, %c0_i32_0 : i32, i32
  }
  func.func @transform_2(%arg0: i32) -> (i32, i32) {
    %c0_i32 = arith.constant 0 : i32
    %c0_i32_0 = arith.constant 0 : i32
    %c0_i32_1 = arith.constant 0 : i32
    return %c0_i32, %c0_i32_0 : i32, i32
  }
  func.func @transform_3(%arg0: i32) -> (i32, i32) {
    %c0_i32 = arith.constant 0 : i32
    %c0_i32_0 = arith.constant 0 : i32
    %c0_i32_1 = arith.constant 0 : i32
    return %c0_i32, %c0_i32_0 : i32, i32
  }
  func.func @transform_4(%arg0: i32) -> i32 {
    %c0_i32 = arith.constant 0 : i32
    %c0_i32_0 = arith.constant 0 : i32
    return %c0_i32 : i32
  }
  func.func @transform_5(%arg0: i32) -> (i32, i32) {
    %c0_i32 = arith.constant 0 : i32
    %c0_i32_0 = arith.constant 0 : i32
    return %c0_i32, %arg0 : i32, i32
  }
}

</mosaic_0001>

<llo_original>
// kernel: tpu_custom_call.1
$region0: #{tpu_custom_call.1}
  #allocation0 [shape = 'u32[]', space=smem, size = 0x4, offset = 0x4, fixed_abs, tag = 'smem constant byte address 0x4 - core index']
  #allocation1 [shape = 'u32[144,128]{1,0:T(1,128)}', space=vmem, size = 0x12000, scoped, tag = 'internal scratch']
  #allocation2 [shape = 'f32[1]{0:T(128)S(6)}', space=smem, size = 0x200, scoped, tag = 'scoped memory for tpu_custom_call.1']
  %s0 = inlined_call_operand.vmem [shape: f32[2,128], index: 0, kind: input, shape index: {}]
  %s1 = inlined_call_operand.vmem [shape: f32[8,2], index: 1, kind: input, shape index: {}]
  %s2 = inlined_call_operand.vmem [shape: f32[8,1], index: 2, kind: input, shape index: {}]
  %s3 = inlined_call_operand.vmem [shape: f32[8,1], index: 3, kind: input, shape index: {}]
  %s4 = inlined_call_operand.<no memory space> [shape: f32[1], index: 4, kind: input, shape index: {}]
  %s5 = inlined_call_operand.hbm [shape: f32[1,128], index: 5, kind: output, shape index: {}]
  %s6 = sld [smem:[#allocation0]]
  $region30: #{tpu_custom_call.1} parent=0
    _
  %s8 = ssub.s32 1, %s6
  %s9 = scalar_select 0, %s8, %s6
  %10 = sst [smem:[#allocation2]] %s4
  $region1: #{tpu_custom_call.1} parent=0
    #allocation3 [shape = 'u8[512]{0}', space=vmem, size = 0x400, scoped, tag = 'output window, operand 0, single buffered']
    #allocation4 [shape = 's32[1]{0}', space=sflag, size = 0x4, scoped, tag = 'scoped memory for tpu_custom_call.1']
    %11 = vsyncpa [#allocation4], 0
    // Predicated region
    $region2: #{tpu_custom_call.1} parent=1 // pred_check
      _
    $region3: #{tpu_custom_call.1} parent=1 // pred_check_branch
      %13 = sbr.rel (0) target = $region5
    $region4: #{tpu_custom_call.1} parent=1 // pred_region
      _
    $region5: #{tpu_custom_call.1} parent=1 // pred_fallthru
      _
    // Predicated region
    $region6: #{tpu_custom_call.1} parent=1 // pred_check
      _
    $region7: #{tpu_custom_call.1} parent=1 // pred_check_branch
      %15 = sbr.rel (0) target = $region9
    $region8: #{tpu_custom_call.1} parent=1 // pred_region
      _
    $region9: #{tpu_custom_call.1} parent=1 // pred_fallthru
      _
    // Predicated region
    $region10: #{tpu_custom_call.1} parent=1 // pred_check
      _
    $region11: #{tpu_custom_call.1} parent=1 // pred_check_branch
      %17 = sbr.rel (0) target = $region13
    $region12: #{tpu_custom_call.1} parent=1 // pred_region
      _
    $region13: #{tpu_custom_call.1} parent=1 // pred_fallthru
      _
    // Predicated region
    $region14: #{tpu_custom_call.1} parent=1 // pred_check
      _
    $region15: #{tpu_custom_call.1} parent=1 // pred_check_branch
      %19 = sbr.rel (0) target = $region17
    $region16: #{tpu_custom_call.1} parent=1 // pred_region
      _
    $region17: #{tpu_custom_call.1} parent=1 // pred_fallthru
      _
    // Predicated region
    $region18: #{tpu_custom_call.1} parent=1 // pred_check
      _
    $region19: #{tpu_custom_call.1} parent=1 // pred_check_branch
      %21 = sbr.rel (0) target = $region21
    $region20: #{tpu_custom_call.1} parent=1 // pred_region
      _
    $region21: #{tpu_custom_call.1} parent=1 // pred_fallthru
      _
    %v22 = vld [vmem:[%s1] sm:$0xff]
    %v23 = vld [vmem:[%s0] sm:$0x3]
    %v24 = vld [vmem:[%s2] sm:$0xff]
    %26 = vset.pattern.permute.xlu0 0
    %27 = vperm.xlu0 %26, %v24
    %v28 = vpop.permute.xlu0 %27
    %vm30 = vcmask 15360
    %v32 = vsel %vm30, %v22, 0
    %vm34 = vcmask 1041408
    %v36 = vsel %vm34, %v23, 0
    %38 = vmatprep.subr.mxu0 0.0
    %39 = vmatpush1.msra.mxu0 %v36
    %40 = vmatprep.subr.mxu0 0.0
    %41 = vmatpush1.msra.mxu0 0.0
    %42 = vmatprep.subr.mxu0 0.0
    %43 = vmatpush1.msra.mxu0 0.0
    %44 = vmatprep.subr.mxu0 0.0
    %45 = vmatpush1.msra.mxu0 0.0
    %46 = vmatprep.subr.mxu0 0.0
    %47 = vmatpush1.msra.mxu0 0.0
    %48 = vmatprep.subr.mxu0 0.0
    %49 = vmatpush1.msra.mxu0 0.0
    %50 = vmatprep.subr.mxu0 0.0
    %51 = vmatpush1.msra.mxu0 0.0
    %52 = vmatprep.subr.mxu0 0.0
    %53 = vmatpush1.msra.mxu0 0.0
    %54 = vmatprep.subr.mxu0 0.0
    %55 = vmatpush1.msra.mxu0 0.0
    %56 = vmatprep.subr.mxu0 0.0
    %57 = vmatpush1.msra.mxu0 0.0
    %58 = vmatprep.subr.mxu0 0.0
    %59 = vmatpush1.msra.mxu0 0.0
    %60 = vmatprep.subr.mxu0 0.0
    %61 = vmatpush1.msra.mxu0 0.0
    %62 = vmatprep.subr.mxu0 0.0
    %63 = vmatpush1.msra.mxu0 0.0
    %64 = vmatprep.subr.mxu0 0.0
    %65 = vmatpush1.msra.mxu0 0.0
    %66 = vmatprep.subr.mxu0 0.0
    %67 = vmatpush1.msra.mxu0 0.0
    %68 = vmatprep.subr.mxu0 0.0
    %69 = vmatpush1.msra.mxu0 0.0
    %70 = vmatprep.subr.mxu0 0.0
    %71 = vmatpush1.msra.mxu0 0.0
    %72 = vmatprep.subr.mxu0 0.0
    %73 = vmatpush1.msra.mxu0 0.0
    %74 = vmatprep.subr.mxu0 0.0
    %75 = vmatpush1.msra.mxu0 0.0
    %76 = vmatprep.subr.mxu0 0.0
    %77 = vmatpush1.msra.mxu0 0.0
    %78 = vmatprep.subr.mxu0 0.0
    %79 = vmatpush1.msra.mxu0 0.0
    %80 = vmatprep.subr.mxu0 0.0
    %81 = vmatpush1.msra.mxu0 0.0
    %82 = vmatprep.subr.mxu0 0.0
    %83 = vmatpush1.msra.mxu0 0.0
    %84 = vmatprep.subr.mxu0 0.0
    %85 = vmatpush1.msra.mxu0 0.0
    %86 = vmatprep.subr.mxu0 0.0
    %87 = vmatpush1.msra.mxu0 0.0
    %88 = vmatprep.subr.mxu0 0.0
    %89 = vmatpush1.msra.mxu0 0.0
    %90 = vmatprep.subr.mxu0 0.0
    %91 = vmatpush1.msra.mxu0 0.0
    %92 = vmatprep.subr.mxu0 0.0
    %93 = vmatpush1.msra.mxu0 0.0
    %94 = vmatprep.subr.mxu0 0.0
    %95 = vmatpush1.msra.mxu0 0.0
    %96 = vmatprep.subr.mxu0 0.0
    %97 = vmatpush1.msra.mxu0 0.0
    %98 = vmatprep.subr.mxu0 0.0
    %99 = vmatpush1.msra.mxu0 0.0
    %100 = vmatprep.subr.mxu0 0.0
    %101 = vmatpush1.msra.mxu0 0.0
    %102 = vmatprep.mubr.f32.mxu0 0.0
    %103 = vmatmul.mubr.f32.gmra.mrb[0].mxu0 %v32
    %v104 = vpop.f32.mrb[0].mxu0
    %v105 = vadd.f32 %v28, %v104
    %v106 = vpop.f32.mrb[0].mxu0
    %107 = vdwg.mxu0
    %v108 = vtanh.pop %v105
    %v109 = vld [vmem:[%s3] sm:$0xff]
    %111 = vset.pattern.permute.xlu0 0
    %112 = vperm.xlu0 %111, %v109
    %v113 = vpop.permute.xlu0 %112
    %v115 = vmul.f32 %v108, %v113
    %v116 = vrot.slane %v115, 4
    %v117 = vadd.f32 %v115, %v116
    %v118 = vrot.slane %v117, 2
    %v119 = vadd.f32 %v117, %v118
    %v120 = vrot.slane %v119, 1
    %v121 = vadd.f32 %v119, %v120
    %s122 = sld [smem:[#allocation2]]
    %v123 = vstv %s122
    %v124 = vadd.f32 %v121, %v123
    %125 = vst [vmem:[#allocation3] sm:$0x1] %v124
    // Predicated region
    $region22: #{tpu_custom_call.1} parent=1 // pred_check
      _
    $region23: #{tpu_custom_call.1} parent=1 // pred_check_branch
      %127 = sbr.rel (0) target = $region25
    $region24: #{tpu_custom_call.1} parent=1 // pred_region
      %s129 = ssub.s32 16, 16
      %130 = vsyncadd [#allocation4], %s129
      %s132 = sshll.u32 [#allocation3], 4
      %s133 = int_to_ptr.vmem [resolvable:$true] %s132
      %135 = dma.vmem_to_hbm [thread:$0]  %s133, 16, %s5, [#allocation4]
    $region25: #{tpu_custom_call.1} parent=1 // pred_fallthru
      _
    // Predicated region
    $region26: #{tpu_custom_call.1} parent=1 // pred_check
      _
    $region27: #{tpu_custom_call.1} parent=1 // pred_check_branch
      %137 = sbr.rel (0) target = $region29
    $region28: #{tpu_custom_call.1} parent=1 // pred_region
      %138 = dma.done [#allocation4], 16
    $region29: #{tpu_custom_call.1} parent=1 // pred_fallthru
      _
    %139 = vsyncpa [#allocation4], 1

</llo_original>
